<compile_context>
chip_gen: v6e
topology: v6e:2x2x1
jax: 0.10.0
libtpu: 0.0.40
codegen_flags: <defaults>
</compile_context>

<pallas_src>
import functools

import jax
import jax.numpy as jnp
from jax.experimental import pallas as pl
from jax.experimental.pallas import tpu as pltpu


# ----------------------------- kernel ---------------------------------------


def temporal_block_kernel(*refs, K, d, P, L, TL, Whp, offL, use_downsample):
    if use_downsample:
        (xp_ref, xres_ref, w1_ref, b1_ref, w2_ref, b2_ref, wd_ref, bd_ref,
         out_ref, xbuf_ref, sem_ref) = refs
    else:
        (xp_ref, xres_ref, w1_ref, b1_ref, w2_ref, b2_ref,
         out_ref, xbuf_ref, sem_ref) = refs
        wd_ref = bd_ref = None

    Cout = w1_ref.shape[1]
    W1 = TL + P                       # conv1 output width that conv2 consumes

    n = pl.program_id(0)
    l = pl.program_id(1)
    num_l = pl.num_programs(1)
    slot = l % 2

    # ---- manual halo DMA: (Cin, Whp) window of the zero-padded input ---------
    # Double-buffered across L-tiles of one batch (the L grid axis is
    # "arbitrary" => executed in order per batch, so prefetching l+1 is safe).
    def halo_copy(tile, dst_slot):
        base = pl.multiple_of(tile * TL, 128)
        return pltpu.make_async_copy(
            xp_ref.at[n, :, pl.ds(base, Whp)],
            xbuf_ref.at[dst_slot],
            sem_ref.at[dst_slot])

    @pl.when(l == 0)
    def _():                          # prime the pipeline at the start of a batch
        halo_copy(l, 0).start()

    halo_copy(l, slot).wait()         # this tile's halo is now in VMEM

    @pl.when(l + 1 < num_l)
    def _():                          # prefetch next tile's halo behind compute
        halo_copy(l + 1, 1 - slot).start()

    xw = xbuf_ref[slot]               # (Cin, Whp) bf16, zero-padded outside [0, L)

    # ---- conv1 + chomp1 + relu1: K accumulated MXU matmuls (no im2col scratch)
    acc1 = jnp.dot(w1_ref[0], xw[:, 0:W1], preferred_element_type=jnp.float32)
    for t in range(1, K):
        acc1 = acc1 + jnp.dot(w1_ref[t], xw[:, t * d:t * d + W1],
                              preferred_element_type=jnp.float32)
    y1 = jnp.maximum(acc1 + b1_ref[...], 0.0)         # bias + relu in f32
    # Column q of y1 is sequence position l*TL - offL + q.  Zero everything
    # outside [0, L): this realizes conv2's zero padding at both sequence ends.
    pos = jax.lax.broadcasted_iota(jnp.int32, (Cout, W1), 1) + (l * TL - offL)
    y1 = jnp.where((pos >= 0) & (pos < L), y1, 0.0).astype(xw.dtype)
    # dropout1: identity at inference.

    # ---- conv2 + chomp2 + relu2: K accumulated MXU matmuls -------------------
    acc2 = jnp.dot(w2_ref[0], y1[:, 0:TL], preferred_element_type=jnp.float32)
    for t in range(1, K):
        acc2 = acc2 + jnp.dot(w2_ref[t], y1[:, t * d:t * d + TL],
                              preferred_element_type=jnp.float32)
    y2 = jnp.maximum(acc2 + b2_ref[...], 0.0)
    # dropout2: identity at inference.

    # ---- residual (+ optional 1x1 downsample) + final relu -------------------
    x_res = xres_ref[0]               # f32, lane-aligned tile of the original x
    if use_downsample:
        res = jnp.dot(wd_ref[...], x_res,
                      preferred_element_type=jnp.float32) + bd_ref[...]
    else:
        res = x_res                   # identity skip stays in f32
    out_ref[0] = jnp.maximum(y2 + res, 0.0).astype(out_ref.dtype)


# ----------------------------- wrapper ---------------------------------------


def _round_up(x, m):
    return (x + m - 1) // m * m


def temporal_block(x, w1, b1, w2, b2, wd, bd, *, kernel_size, stride, dilation,
                   padding, mxu_dtype=jnp.bfloat16, out_dtype=None,
                   max_tile=512):
    assert stride == 1, "TCN TemporalBlock uses stride=1"
    assert max_tile % 128 == 0 and max_tile >= 128
    N, Cin, L = x.shape
    Cout = w1.shape[0]
    K, d, P = kernel_size, dilation, padding
    assert P == d * (K - 1), "padding must equal dilation*(kernel_size-1)"
    use_downsample = (Cin != Cout)
    out_dtype = x.dtype if out_dtype is None else out_dtype
    # Chomp1d of the provided module: odd P -> drop last P (causal, offL = P);
    # even P -> centered slice [P/2 : -P/2]         (offL = P/2).
    offL = P if (P % 2 != 0) else P // 2

    # L-tile: multiple of 128 (lane-dense stores), never larger than L (so
    # only the last tile is partial), capped at max_tile; grid is ceil-div.
    TL = min(max_tile, max(128, (L // 128) * 128))
    num_l = -(-L // TL)
    if N * num_l < 2 and TL > 128:      # v7x: give both TensorCores work
        TL = max(128, _round_up(-(-L // 2), 128))
        num_l = -(-L // TL)

    # Zero-padded bf16 copy of x for the conv path: xp[:, :, p] == x[:, :, p - 2*offL]
    # (zero outside [0, L)).  Per-tile halo window = [l*TL, l*TL + Whp), lane-
    # rounded and always in bounds, so the in-kernel DMA has a static size.
    # TODO(synk): this padded copy is one extra HBM pass over x; it could be
    # removed with chunked, clamped in-kernel DMAs from the unpadded input.
    Whp = _round_up(TL + 2 * P, 128)
    Lxp = (num_l - 1) * TL + Whp
    x32 = x.astype(jnp.float32)
    xp = jnp.pad(x32, ((0, 0), (0, 0),
                       (2 * offL, Lxp - 2 * offL - L))).astype(mxu_dtype)

    # f32 residual operand / output length.  For L >= 128 the output is emitted
    # at its logical length (masked stores only on the last partial tile).  For
    # toy L < 128 we lane-pad and slice (negligible at that size) so no
    # BlockSpec block exceeds its array dimension.
    if L >= TL:
        xr, Lout = x32, L
    else:
        Lout = TL
        xr = jnp.pad(x32, ((0, 0), (0, 0), (0, Lout - L)))

    # Per-tap weights stacked as (K, Cout, C): each conv runs as K accumulated
    # matmuls, w[..., t] applied to the window shifted by t*dilation.
    w1s = jnp.transpose(w1, (2, 0, 1)).astype(mxu_dtype)     # (K, Cout, Cin)
    w2s = jnp.transpose(w2, (2, 0, 1)).astype(mxu_dtype)     # (K, Cout, Cout)
    b1c = b1.reshape(Cout, 1).astype(jnp.float32)
    b2c = b2.reshape(Cout, 1).astype(jnp.float32)

    operands = [xp, xr, w1s, b1c, w2s, b2c]
    in_specs = [
        pl.BlockSpec(memory_space=pl.ANY),                     # conv input: manual halo DMA
        pl.BlockSpec((1, Cin, TL), lambda n, l: (n, 0, l)),    # f32 residual tile (aligned)
        pl.BlockSpec((K, Cout, Cin), lambda n, l: (0, 0, 0)),
        pl.BlockSpec((Cout, 1), lambda n, l: (0, 0)),
        pl.BlockSpec((K, Cout, Cout), lambda n, l: (0, 0, 0)),
        pl.BlockSpec((Cout, 1), lambda n, l: (0, 0)),
    ]
    if use_downsample:                 # only DMA downsample weights if needed
        operands += [wd.reshape(Cout, Cin).astype(jnp.float32),
                     bd.reshape(Cout, 1).astype(jnp.float32)]
        in_specs += [pl.BlockSpec((Cout, Cin), lambda n, l: (0, 0)),
                     pl.BlockSpec((Cout, 1), lambda n, l: (0, 0))]

    kernel = functools.partial(
        temporal_block_kernel, K=K, d=d, P=P, L=L, TL=TL, Whp=Whp, offL=offL,
        use_downsample=use_downsample)

    out = pl.pallas_call(
        kernel,
        out_shape=jax.ShapeDtypeStruct((N, Cout, Lout), out_dtype),
        grid=(N, num_l),
        in_specs=in_specs,
        out_specs=pl.BlockSpec((1, Cout, TL), lambda n, l: (n, 0, l)),
        scratch_shapes=[pltpu.VMEM((2, Cin, Whp), mxu_dtype),   # halo double buffer
                        pltpu.SemaphoreType.DMA((2,))],
        compiler_params=pltpu.CompilerParams(
            # L axis must be "arbitrary": the cross-tile halo prefetch relies
            # on sequential execution of l within a batch.
            dimension_semantics=("parallel", "arbitrary"),
            # Per-step working set is O(TL), comfortably under v7x's budget;
            # v5e/v6e (128 MiB physical) can raise this together with max_tile.
            vmem_limit_bytes=32 * 1024 * 1024),
    )(*operands)
    return out if Lout == L else out[:, :, :L]


# ----------------------------- reference & params ----------------------------


def apply_weight_norm(v, g):
    # w = g * v / ||v||, norm over all dims except the output-channel dim (0).
    norm = jnp.sqrt(jnp.sum(v * v, axis=tuple(range(1, v.ndim)), keepdims=True))
    return g.reshape((-1,) + (1,) * (v.ndim - 1)) * v / norm


def conv1d_ref(x, w, b, stride, padding, dilation):
    out = jax.lax.conv_general_dilated(
        x, w, window_strides=(stride,), padding=[(padding, padding)],
        rhs_dilation=(dilation,), dimension_numbers=("NCH", "OIH", "NCH"),
        precision=jax.lax.Precision.HIGHEST)
    return out + b[None, :, None]


def chomp_ref(y, P):
    # Mirrors the provided Chomp1d: odd -> drop last P, even -> centered slice.
    if P % 2 != 0:
        return y[:, :, : y.shape[2] - P]
    return y[:, :, P // 2: y.shape[2] - P // 2]


def _maybe_bf16(a, do):
    return a.astype(jnp.bfloat16).astype(jnp.float32) if do else a


def temporal_block_ref(x, w1, b1, w2, b2, wd, bd, *, kernel_size, stride,
                       dilation, padding, mirror_bf16=False):
    # mirror_bf16=True reproduces the kernel's bf16-at-the-MXU quantization
    # points (conv path only -- the residual stays f32, exactly like the
    # kernel) so the structural/indexing correctness can be checked tightly.
    P = padding
    xq = _maybe_bf16(x, mirror_bf16)
    w1q = _maybe_bf16(w1, mirror_bf16)
    w2q = _maybe_bf16(w2, mirror_bf16)
    out = conv1d_ref(xq, w1q, b1, stride, P, dilation)
    out = jnp.maximum(chomp_ref(out, P), 0.0)
    out = _maybe_bf16(out, mirror_bf16)      # kernel feeds bf16 into 2nd MXU pass
    out = conv1d_ref(out, w2q, b2, stride, P, dilation)
    out = jnp.maximum(chomp_ref(out, P), 0.0)
    if x.shape[1] != w1.shape[0]:
        res = conv1d_ref(x, wd, bd, 1, 0, 1)   # residual path stays f32
    else:
        res = x
    return jnp.maximum(out + res, 0.0)


# ----------------------------- main -------------------------------------------


def _run_case(key, *, N, Cin, Cout, L, K, d):
    P = (K - 1) * d
    ks = jax.random.split(key, 9)
    # weight_norm parameterization: v ~ N(0, 0.01), g near 1.
    v1 = 0.01 * jax.random.normal(ks[0], (Cout, Cin, K), jnp.float32)
    g1 = 1.0 + 0.1 * jax.random.normal(ks[1], (Cout,), jnp.float32)
    b1 = 0.01 * jax.random.normal(ks[2], (Cout,), jnp.float32)
    v2 = 0.01 * jax.random.normal(ks[3], (Cout, Cout, K), jnp.float32)
    g2 = 1.0 + 0.1 * jax.random.normal(ks[4], (Cout,), jnp.float32)
    b2 = 0.01 * jax.random.normal(ks[5], (Cout,), jnp.float32)
    wd = 0.01 * jax.random.normal(ks[6], (Cout, Cin, 1), jnp.float32)
    bd = 0.01 * jax.random.normal(ks[7], (Cout,), jnp.float32)
    x = jax.random.normal(ks[8], (N, Cin, L), jnp.float32)

    w1 = apply_weight_norm(v1, g1)
    w2 = apply_weight_norm(v2, g2)

    out = temporal_block(x, w1, b1, w2, b2, wd, bd,
                         kernel_size=K, stride=1, dilation=d, padding=P)
    out = jax.block_until_ready(out)
    assert out.shape == (N, Cout, L), out.shape

    # (1) tight check against a reference that mirrors the kernel's bf16 MXU
    #     input quantization -- validates the fused conv indexing exactly.
    ref_q = temporal_block_ref(x, w1, b1, w2, b2, wd, bd, kernel_size=K,
                               stride=1, dilation=d, padding=P,
                               mirror_bf16=True)
    err_q = float(jnp.max(jnp.abs(out - ref_q)))
    assert err_q < 1e-3, err_q

    # (2) sanity bound against the pure-f32 module reference (bf16 MXU inputs
    #     introduce ~1% numerics on the conv path).
    ref_f = temporal_block_ref(x, w1, b1, w2, b2, wd, bd, kernel_size=K,
                               stride=1, dilation=d, padding=P,
                               mirror_bf16=False)
    assert jnp.allclose(out, ref_f, atol=1e-1, rtol=1e-1), (
        float(jnp.max(jnp.abs(out - ref_f))))


if __name__ == "__main__":
    key = jax.random.PRNGKey(0)
    k1, k2, k3 = jax.random.split(key, 3)
    # even padding (centered chomp) + 1x1 downsample residual
    _run_case(k1, N=2, Cin=4, Cout=8, L=16, K=3, d=2)
    # odd padding (causal chomp) + identity residual
    _run_case(k2, N=2, Cin=8, Cout=8, L=16, K=2, d=1)
    # multi-tile L (partial last tile, cross-tile halo prefetch, v7x TL split)
    _run_case(k3, N=1, Cin=8, Cout=16, L=300, K=3, d=4)
    print("KERNEL_OK")
</pallas_src>

<mosaic_0001>
module attributes {stable_mosaic.version = 11 : i64} {
  func.func @temporal_block_kernel(%arg0: i32, %arg1: i32, %arg2: memref<2x4x256xbf16, #tpu.memory_space<any>>, %arg3: memref<1x4x128xf32, #tpu.memory_space<vmem>>, %arg4: memref<3x8x4xbf16, #tpu.memory_space<vmem>>, %arg5: memref<8x1xf32, #tpu.memory_space<vmem>>, %arg6: memref<3x8x8xbf16, #tpu.memory_space<vmem>>, %arg7: memref<8x1xf32, #tpu.memory_space<vmem>>, %arg8: memref<8x4xf32, #tpu.memory_space<vmem>>, %arg9: memref<8x1xf32, #tpu.memory_space<vmem>>, %arg10: memref<1x8x128xf32, #tpu.memory_space<vmem>>, %arg11: memref<2x4x256xbf16, #tpu.memory_space<vmem>>, %arg12: memref<2x!tpu.dma_semaphore, #tpu.memory_space<semaphore_mem>>) attributes {dimension_semantics = [#tpu.dimension_semantics<parallel>, #tpu.dimension_semantics<arbitrary>], iteration_bounds = array<i64: 2, 1>, scalar_prefetch = 0 : i64, scratch_operands = 2 : i64, tpu.core_type = #tpu.core_type<tc>, window_params = [{}, {transform_indices = @transform_1, window_bounds = array<i64: 1, 4, 128>}, {pipeline_mode = #tpu.pipeline_mode<synchronous>, transform_indices = @transform_2, window_bounds = array<i64: 3, 8, 4>}, {pipeline_mode = #tpu.pipeline_mode<synchronous>, transform_indices = @transform_3, window_bounds = array<i64: 8, 1>}, {pipeline_mode = #tpu.pipeline_mode<synchronous>, transform_indices = @transform_4, window_bounds = array<i64: 3, 8, 8>}, {pipeline_mode = #tpu.pipeline_mode<synchronous>, transform_indices = @transform_5, window_bounds = array<i64: 8, 1>}, {pipeline_mode = #tpu.pipeline_mode<synchronous>, transform_indices = @transform_6, window_bounds = array<i64: 8, 4>}, {pipeline_mode = #tpu.pipeline_mode<synchronous>, transform_indices = @transform_7, window_bounds = array<i64: 8, 1>}, {transform_indices = @transform_8, window_bounds = array<i64: 1, 8, 128>}]} {
    %c2_i32 = arith.constant 2 : i32
    %c0_i32 = arith.constant 0 : i32
    %0 = arith.cmpi eq, %c2_i32, %c0_i32 : i32
    %c1_i32 = arith.constant 1 : i32
    %1 = arith.select %0, %c1_i32, %c2_i32 : i32
    %2 = arith.remsi %arg1, %1 : i32
    %c0_i32_0 = arith.constant 0 : i32
    %3 = arith.cmpi ne, %2, %c0_i32_0 : i32
    %c0_i32_1 = arith.constant 0 : i32
    %4 = arith.cmpi slt, %2, %c0_i32_1 : i32
    %c0_i32_2 = arith.constant 0 : i32
    %5 = arith.cmpi slt, %1, %c0_i32_2 : i32
    %6 = arith.xori %4, %5 : i1
    %7 = arith.andi %6, %3 : i1
    %8 = arith.addi %2, %1 : i32
    %9 = arith.select %7, %8, %2 : i32
    %c0_i32_3 = arith.constant 0 : i32
    %10 = arith.cmpi eq, %arg1, %c0_i32_3 : i32
    %11 = arith.extui %10 : i1 to i32
    %c0_i32_4 = arith.constant 0 : i32
    %12 = arith.cmpi ne, %11, %c0_i32_4 : i32
    scf.if %12 {
      %c128_i32_55 = arith.constant 128 : i32
      %92 = arith.muli %arg1, %c128_i32_55 : i32
      %93 = tpu.assume_multiple %92, 128 : i32
      %c0_i32_56 = arith.constant 0 : i32
      %c0_i32_57 = arith.constant 0 : i32
      %c0_i32_58 = arith.constant 0 : i32
      %94 = tpu.memref_slice %arg2[%arg0, %c0_i32_58, %93] : memref<2x4x256xbf16, #tpu.memory_space<any>> -> memref<1x4x256xbf16, #tpu.memory_space<any>>
      %95 = tpu.memref_squeeze %94 : memref<1x4x256xbf16, #tpu.memory_space<any>> -> memref<4x256xbf16, #tpu.memory_space<any>>
      %c0_i32_59 = arith.constant 0 : i32
      %c0_i32_60 = arith.constant 0 : i32
      %96 = tpu.memref_slice %arg11[%c0_i32_56, %c0_i32_59, %c0_i32_60] : memref<2x4x256xbf16, #tpu.memory_space<vmem>> -> memref<1x4x256xbf16, #tpu.memory_space<vmem>>
      %97 = tpu.memref_squeeze %96 : memref<1x4x256xbf16, #tpu.memory_space<vmem>> -> memref<4x256xbf16, #tpu.memory_space<vmem>>
      %98 = tpu.memref_slice %arg12[%c0_i32_57] : memref<2x!tpu.dma_semaphore, #tpu.memory_space<semaphore_mem>> -> memref<1x!tpu.dma_semaphore, #tpu.memory_space<semaphore_mem>>
      %99 = tpu.memref_squeeze %98 : memref<1x!tpu.dma_semaphore, #tpu.memory_space<semaphore_mem>> -> memref<!tpu.dma_semaphore, #tpu.memory_space<semaphore_mem>>
      tpu.enqueue_dma source(%95 : memref<4x256xbf16, #tpu.memory_space<any>>) target(%97 : memref<4x256xbf16, #tpu.memory_space<vmem>>) target_semaphore(%99 : memref<!tpu.dma_semaphore, #tpu.memory_space<semaphore_mem>>)
    } else {
    }
    %c128_i32 = arith.constant 128 : i32
    %13 = arith.muli %arg1, %c128_i32 : i32
    %14 = tpu.assume_multiple %13, 128 : i32
    %c0_i32_5 = arith.constant 0 : i32
    %15 = tpu.memref_slice %arg2[%arg0, %c0_i32_5, %14] : memref<2x4x256xbf16, #tpu.memory_space<any>> -> memref<1x4x256xbf16, #tpu.memory_space<any>>
    %16 = tpu.memref_squeeze %15 : memref<1x4x256xbf16, #tpu.memory_space<any>> -> memref<4x256xbf16, #tpu.memory_space<any>>
    %c0_i32_6 = arith.constant 0 : i32
    %c0_i32_7 = arith.constant 0 : i32
    %17 = tpu.memref_slice %arg11[%9, %c0_i32_6, %c0_i32_7] : memref<2x4x256xbf16, #tpu.memory_space<vmem>> -> memref<1x4x256xbf16, #tpu.memory_space<vmem>>
    %18 = tpu.memref_squeeze %17 : memref<1x4x256xbf16, #tpu.memory_space<vmem>> -> memref<4x256xbf16, #tpu.memory_space<vmem>>
    %19 = tpu.memref_slice %arg12[%9] : memref<2x!tpu.dma_semaphore, #tpu.memory_space<semaphore_mem>> -> memref<1x!tpu.dma_semaphore, #tpu.memory_space<semaphore_mem>>
    %20 = tpu.memref_squeeze %19 : memref<1x!tpu.dma_semaphore, #tpu.memory_space<semaphore_mem>> -> memref<!tpu.dma_semaphore, #tpu.memory_space<semaphore_mem>>
    tpu.wait_dma2 semaphore(%20 : memref<!tpu.dma_semaphore, #tpu.memory_space<semaphore_mem>>) src(%16 : memref<4x256xbf16, #tpu.memory_space<any>>) dst(%18 : memref<4x256xbf16, #tpu.memory_space<vmem>>)
    %c1_i32_8 = arith.constant 1 : i32
    %21 = arith.addi %arg1, %c1_i32_8 : i32
    %c1_i32_9 = arith.constant 1 : i32
    %22 = arith.cmpi slt, %21, %c1_i32_9 : i32
    %23 = arith.extui %22 : i1 to i32
    %c0_i32_10 = arith.constant 0 : i32
    %24 = arith.cmpi ne, %23, %c0_i32_10 : i32
    scf.if %24 {
      %c1_i32_55 = arith.constant 1 : i32
      %92 = arith.addi %arg1, %c1_i32_55 : i32
      %c1_i32_56 = arith.constant 1 : i32
      %93 = arith.subi %c1_i32_56, %9 : i32
      %c128_i32_57 = arith.constant 128 : i32
      %94 = arith.muli %92, %c128_i32_57 : i32
      %95 = tpu.assume_multiple %94, 128 : i32
      %c0_i32_58 = arith.constant 0 : i32
      %96 = tpu.memref_slice %arg2[%arg0, %c0_i32_58, %95] : memref<2x4x256xbf16, #tpu.memory_space<any>> -> memref<1x4x256xbf16, #tpu.memory_space<any>>
      %97 = tpu.memref_squeeze %96 : memref<1x4x256xbf16, #tpu.memory_space<any>> -> memref<4x256xbf16, #tpu.memory_space<any>>
      %c0_i32_59 = arith.constant 0 : i32
      %c0_i32_60 = arith.constant 0 : i32
      %98 = tpu.memref_slice %arg11[%93, %c0_i32_59, %c0_i32_60] : memref<2x4x256xbf16, #tpu.memory_space<vmem>> -> memref<1x4x256xbf16, #tpu.memory_space<vmem>>
      %99 = tpu.memref_squeeze %98 : memref<1x4x256xbf16, #tpu.memory_space<vmem>> -> memref<4x256xbf16, #tpu.memory_space<vmem>>
      %100 = tpu.memref_slice %arg12[%93] : memref<2x!tpu.dma_semaphore, #tpu.memory_space<semaphore_mem>> -> memref<1x!tpu.dma_semaphore, #tpu.memory_space<semaphore_mem>>
      %101 = tpu.memref_squeeze %100 : memref<1x!tpu.dma_semaphore, #tpu.memory_space<semaphore_mem>> -> memref<!tpu.dma_semaphore, #tpu.memory_space<semaphore_mem>>
      tpu.enqueue_dma source(%97 : memref<4x256xbf16, #tpu.memory_space<any>>) target(%99 : memref<4x256xbf16, #tpu.memory_space<vmem>>) target_semaphore(%101 : memref<!tpu.dma_semaphore, #tpu.memory_space<semaphore_mem>>)
    } else {
    }
    %25 = arith.index_cast %9 : i32 to index
    %c0 = arith.constant 0 : index
    %c0_11 = arith.constant 0 : index
    %26 = vector.load %arg11[%25, %c0, %c0_11] : memref<2x4x256xbf16, #tpu.memory_space<vmem>>, vector<1x4x256xbf16>
    %27 = vector.shape_cast %26 : vector<1x4x256xbf16> to vector<4x256xbf16>
    %c0_12 = arith.constant 0 : index
    %c0_13 = arith.constant 0 : index
    %c0_14 = arith.constant 0 : index
    %28 = vector.load %arg4[%c0_12, %c0_13, %c0_14] : memref<3x8x4xbf16, #tpu.memory_space<vmem>>, vector<1x8x4xbf16>
    %29 = vector.shape_cast %28 : vector<1x8x4xbf16> to vector<8x4xbf16>
    %30 = vector.extract_strided_slice %27 {offsets = [0, 0], sizes = [4, 132], strides = [1, 1]} : vector<4x256xbf16> to vector<4x132xbf16>
    %cst = arith.constant dense<0.000000e+00> : vector<8x132xf32>
    %31 = tpu.matmul %29, %30, %cst {dimension_numbers = #tpu.dot_dimension_numbers<[1], [0], [0], [1], [0, 0, 1, 1], [], []>} : vector<8x4xbf16>, vector<4x132xbf16>, vector<8x132xf32> -> vector<8x132xf32>
    %c1 = arith.constant 1 : index
    %c0_15 = arith.constant 0 : index
    %c0_16 = arith.constant 0 : index
    %32 = vector.load %arg4[%c1, %c0_15, %c0_16] : memref<3x8x4xbf16, #tpu.memory_space<vmem>>, vector<1x8x4xbf16>
    %33 = vector.shape_cast %32 : vector<1x8x4xbf16> to vector<8x4xbf16>
    %34 = vector.extract_strided_slice %27 {offsets = [0, 2], sizes = [4, 132], strides = [1, 1]} : vector<4x256xbf16> to vector<4x132xbf16>
    %cst_17 = arith.constant dense<0.000000e+00> : vector<8x132xf32>
    %35 = tpu.matmul %33, %34, %cst_17 {dimension_numbers = #tpu.dot_dimension_numbers<[1], [0], [0], [1], [0, 0, 1, 1], [], []>} : vector<8x4xbf16>, vector<4x132xbf16>, vector<8x132xf32> -> vector<8x132xf32>
    %36 = arith.addf %31, %35 : vector<8x132xf32>
    %c2 = arith.constant 2 : index
    %c0_18 = arith.constant 0 : index
    %c0_19 = arith.constant 0 : index
    %37 = vector.load %arg4[%c2, %c0_18, %c0_19] : memref<3x8x4xbf16, #tpu.memory_space<vmem>>, vector<1x8x4xbf16>
    %38 = vector.shape_cast %37 : vector<1x8x4xbf16> to vector<8x4xbf16>
    %39 = vector.extract_strided_slice %27 {offsets = [0, 4], sizes = [4, 132], strides = [1, 1]} : vector<4x256xbf16> to vector<4x132xbf16>
    %cst_20 = arith.constant dense<0.000000e+00> : vector<8x132xf32>
    %40 = tpu.matmul %38, %39, %cst_20 {dimension_numbers = #tpu.dot_dimension_numbers<[1], [0], [0], [1], [0, 0, 1, 1], [], []>} : vector<8x4xbf16>, vector<4x132xbf16>, vector<8x132xf32> -> vector<8x132xf32>
    %41 = arith.addf %36, %40 : vector<8x132xf32>
    %c0_21 = arith.constant 0 : index
    %c0_22 = arith.constant 0 : index
    %42 = vector.load %arg5[%c0_21, %c0_22] : memref<8x1xf32, #tpu.memory_space<vmem>>, vector<8x1xf32>
    %43 = vector.broadcast %42 : vector<8x1xf32> to vector<8x132xf32>
    %44 = arith.addf %41, %43 : vector<8x132xf32>
    %cst_23 = arith.constant 0.000000e+00 : f32
    %45 = vector.broadcast %cst_23 : f32 to vector<8x132xf32>
    %46 = arith.maximumf %44, %45 : vector<8x132xf32>
    %47 = tpu.iota {dimensions = array<i32: 1>} : vector<8x132xi32>
    %c128_i32_24 = arith.constant 128 : i32
    %48 = arith.muli %arg1, %c128_i32_24 : i32
    %c2_i32_25 = arith.constant 2 : i32
    %49 = arith.subi %48, %c2_i32_25 : i32
    %50 = vector.broadcast %49 : i32 to vector<8x132xi32>
    %51 = arith.addi %47, %50 : vector<8x132xi32>
    %c0_i32_26 = arith.constant 0 : i32
    %52 = vector.broadcast %c0_i32_26 : i32 to vector<8x132xi32>
    %53 = arith.cmpi sge, %51, %52 : vector<8x132xi32>
    %c16_i32 = arith.constant 16 : i32
    %54 = vector.broadcast %c16_i32 : i32 to vector<8x132xi32>
    %55 = arith.cmpi slt, %51, %54 : vector<8x132xi32>
    %56 = arith.andi %53, %55 : vector<8x132xi1>
    %cst_27 = arith.constant 0.000000e+00 : f32
    %57 = vector.broadcast %cst_27 : f32 to vector<8x132xf32>
    %58 = arith.select %56, %46, %57 : vector<8x132xi1>, vector<8x132xf32>
    %59 = arith.truncf %58 : vector<8x132xf32> to vector<8x132xbf16>
    %c0_28 = arith.constant 0 : index
    %c0_29 = arith.constant 0 : index
    %c0_30 = arith.constant 0 : index
    %60 = vector.load %arg6[%c0_28, %c0_29, %c0_30] : memref<3x8x8xbf16, #tpu.memory_space<vmem>>, vector<1x8x8xbf16>
    %61 = vector.shape_cast %60 : vector<1x8x8xbf16> to vector<8x8xbf16>
    %62 = vector.extract_strided_slice %59 {offsets = [0, 0], sizes = [8, 128], strides = [1, 1]} : vector<8x132xbf16> to vector<8x128xbf16>
    %cst_31 = arith.constant dense<0.000000e+00> : vector<8x128xf32>
    %63 = tpu.matmul %61, %62, %cst_31 {dimension_numbers = #tpu.dot_dimension_numbers<[1], [0], [0], [1], [0, 0, 1, 1], [], []>} : vector<8x8xbf16>, vector<8x128xbf16>, vector<8x128xf32> -> vector<8x128xf32>
    %c1_32 = arith.constant 1 : index
    %c0_33 = arith.constant 0 : index
    %c0_34 = arith.constant 0 : index
    %64 = vector.load %arg6[%c1_32, %c0_33, %c0_34] : memref<3x8x8xbf16, #tpu.memory_space<vmem>>, vector<1x8x8xbf16>
    %65 = vector.shape_cast %64 : vector<1x8x8xbf16> to vector<8x8xbf16>
    %66 = vector.extract_strided_slice %59 {offsets = [0, 2], sizes = [8, 128], strides = [1, 1]} : vector<8x132xbf16> to vector<8x128xbf16>
    %cst_35 = arith.constant dense<0.000000e+00> : vector<8x128xf32>
    %67 = tpu.matmul %65, %66, %cst_35 {dimension_numbers = #tpu.dot_dimension_numbers<[1], [0], [0], [1], [0, 0, 1, 1], [], []>} : vector<8x8xbf16>, vector<8x128xbf16>, vector<8x128xf32> -> vector<8x128xf32>
    %68 = arith.addf %63, %67 : vector<8x128xf32>
    %c2_36 = arith.constant 2 : index
    %c0_37 = arith.constant 0 : index
    %c0_38 = arith.constant 0 : index
    %69 = vector.load %arg6[%c2_36, %c0_37, %c0_38] : memref<3x8x8xbf16, #tpu.memory_space<vmem>>, vector<1x8x8xbf16>
    %70 = vector.shape_cast %69 : vector<1x8x8xbf16> to vector<8x8xbf16>
    %71 = vector.extract_strided_slice %59 {offsets = [0, 4], sizes = [8, 128], strides = [1, 1]} : vector<8x132xbf16> to vector<8x128xbf16>
    %cst_39 = arith.constant dense<0.000000e+00> : vector<8x128xf32>
    %72 = tpu.matmul %70, %71, %cst_39 {dimension_numbers = #tpu.dot_dimension_numbers<[1], [0], [0], [1], [0, 0, 1, 1], [], []>} : vector<8x8xbf16>, vector<8x128xbf16>, vector<8x128xf32> -> vector<8x128xf32>
    %73 = arith.addf %68, %72 : vector<8x128xf32>
    %c0_40 = arith.constant 0 : index
    %c0_41 = arith.constant 0 : index
    %74 = vector.load %arg7[%c0_40, %c0_41] : memref<8x1xf32, #tpu.memory_space<vmem>>, vector<8x1xf32>
    %75 = vector.broadcast %74 : vector<8x1xf32> to vector<8x128xf32>
    %76 = arith.addf %73, %75 : vector<8x128xf32>
    %cst_42 = arith.constant 0.000000e+00 : f32
    %77 = vector.broadcast %cst_42 : f32 to vector<8x128xf32>
    %78 = arith.maximumf %76, %77 : vector<8x128xf32>
    %c0_43 = arith.constant 0 : index
    %c0_44 = arith.constant 0 : index
    %c0_45 = arith.constant 0 : index
    %79 = vector.load %arg3[%c0_43, %c0_44, %c0_45] : memref<1x4x128xf32, #tpu.memory_space<vmem>>, vector<1x4x128xf32>
    %80 = vector.shape_cast %79 : vector<1x4x128xf32> to vector<4x128xf32>
    %c0_46 = arith.constant 0 : index
    %c0_47 = arith.constant 0 : index
    %81 = vector.load %arg8[%c0_46, %c0_47] : memref<8x4xf32, #tpu.memory_space<vmem>>, vector<8x4xf32>
    %cst_48 = arith.constant dense<0.000000e+00> : vector<8x128xf32>
    %82 = tpu.matmul %81, %80, %cst_48 {dimension_numbers = #tpu.dot_dimension_numbers<[1], [0], [0], [1], [0, 0, 1, 1], [], []>} : vector<8x4xf32>, vector<4x128xf32>, vector<8x128xf32> -> vector<8x128xf32>
    %c0_49 = arith.constant 0 : index
    %c0_50 = arith.constant 0 : index
    %83 = vector.load %arg9[%c0_49, %c0_50] : memref<8x1xf32, #tpu.memory_space<vmem>>, vector<8x1xf32>
    %84 = vector.broadcast %83 : vector<8x1xf32> to vector<8x128xf32>
    %85 = arith.addf %82, %84 : vector<8x128xf32>
    %86 = arith.addf %78, %85 : vector<8x128xf32>
    %cst_51 = arith.constant 0.000000e+00 : f32
    %87 = vector.broadcast %cst_51 : f32 to vector<8x128xf32>
    %88 = arith.maximumf %86, %87 : vector<8x128xf32>
    %c0_52 = arith.constant 0 : index
    %c0_53 = arith.constant 0 : index
    %c0_54 = arith.constant 0 : index
    %89 = vector.load %arg10[%c0_52, %c0_53, %c0_54] : memref<1x8x128xf32, #tpu.memory_space<vmem>>, vector<1x8x128xf32>
    %90 = vector.shape_cast %89 : vector<1x8x128xf32> to vector<8x128xf32>
    %91 = vector.shape_cast %88 : vector<8x128xf32> to vector<1x8x128xf32>
    tpu.vector_store %arg10[%c0_52, %c0_53, %c0_54], %91 {strides = array<i32>} : memref<1x8x128xf32, #tpu.memory_space<vmem>>, vector<1x8x128xf32>,
    return
  }
  func.func @transform_1(%arg0: i32, %arg1: i32) -> (i32, i32, i32) {
    %c0_i32 = arith.constant 0 : i32
    %c0_i32_0 = arith.constant 0 : i32
    return %arg0, %c0_i32, %arg1 : i32, i32, i32
  }
  func.func @transform_2(%arg0: i32, %arg1: i32) -> (i32, i32, i32) {
    %c0_i32 = arith.constant 0 : i32
    %c0_i32_0 = arith.constant 0 : i32
    %c0_i32_1 = arith.constant 0 : i32
    %c0_i32_2 = arith.constant 0 : i32
    return %c0_i32, %c0_i32_0, %c0_i32_1 : i32, i32, i32
  }
  func.func @transform_3(%arg0: i32, %arg1: i32) -> (i32, i32) {
    %c0_i32 = arith.constant 0 : i32
    %c0_i32_0 = arith.constant 0 : i32
    %c0_i32_1 = arith.constant 0 : i32
    return %c0_i32, %c0_i32_0 : i32, i32
  }
  func.func @transform_4(%arg0: i32, %arg1: i32) -> (i32, i32, i32) {
    %c0_i32 = arith.constant 0 : i32
    %c0_i32_0 = arith.constant 0 : i32
    %c0_i32_1 = arith.constant 0 : i32
    %c0_i32_2 = arith.constant 0 : i32
    return %c0_i32, %c0_i32_0, %c0_i32_1 : i32, i32, i32
  }
  func.func @transform_5(%arg0: i32, %arg1: i32) -> (i32, i32) {
    %c0_i32 = arith.constant 0 : i32
    %c0_i32_0 = arith.constant 0 : i32
    %c0_i32_1 = arith.constant 0 : i32
    return %c0_i32, %c0_i32_0 : i32, i32
  }
  func.func @transform_6(%arg0: i32, %arg1: i32) -> (i32, i32) {
    %c0_i32 = arith.constant 0 : i32
    %c0_i32_0 = arith.constant 0 : i32
    %c0_i32_1 = arith.constant 0 : i32
    return %c0_i32, %c0_i32_0 : i32, i32
  }
  func.func @transform_7(%arg0: i32, %arg1: i32) -> (i32, i32) {
    %c0_i32 = arith.constant 0 : i32
    %c0_i32_0 = arith.constant 0 : i32
    %c0_i32_1 = arith.constant 0 : i32
    return %c0_i32, %c0_i32_0 : i32, i32
  }
  func.func @transform_8(%arg0: i32, %arg1: i32) -> (i32, i32, i32) {
    %c0_i32 = arith.constant 0 : i32
    %c0_i32_0 = arith.constant 0 : i32
    return %arg0, %c0_i32, %arg1 : i32, i32, i32
  }
}

</mosaic_0001>

<llo_original>
// kernel: tpu_custom_call.1
$region0: #{tpu_custom_call.1}
  #allocation0 [shape = 'u32[]', space=smem, size = 0x4, offset = 0x4, fixed_abs, tag = 'smem constant byte address 0x4 - core index']
  #allocation1 [shape = 'u32[144,128]{1,0:T(1,128)}', space=vmem, size = 0x12000, scoped, tag = 'internal scratch']
  #allocation2 [shape = 'bf16[2,4,256]{2,1,0:T(4,128)(2,1)}', space=vmem, size = 0x1000, scoped, tag = 'scratch operand']
  #allocation3 [shape = 's32[2]{0}', space=sflag, size = 0x8, scoped, tag = 'scratch operand']
  #allocation6 [shape = 's32[]', space=sflag, size = 0x4, offset = 0, fixed_abs, tag = 'sflag constant byte address 0x0 - dummy sync flag']
  #allocation7 [shape = 's32[]', space=sflag, size = 0x4, offset = 0, fixed_abs, tag = 'sflag constant byte address 0x0 - dummy sync flag']
  %s0 = inlined_call_operand.vmem [shape: bf16[2,4,256], index: 0, kind: input, shape index: {}]
  %s1 = inlined_call_operand.vmem [shape: f32[2,4,128], index: 1, kind: input, shape index: {}]
  %s2 = inlined_call_operand.vmem [shape: bf16[3,8,4], index: 2, kind: input, shape index: {}]
  %s3 = inlined_call_operand.vmem [shape: f32[8,1], index: 3, kind: input, shape index: {}]
  %s4 = inlined_call_operand.vmem [shape: bf16[3,8,8], index: 4, kind: input, shape index: {}]
  %s5 = inlined_call_operand.vmem [shape: f32[8,1], index: 5, kind: input, shape index: {}]
  %s6 = inlined_call_operand.vmem [shape: f32[8,4], index: 6, kind: input, shape index: {}]
  %s7 = inlined_call_operand.vmem [shape: f32[8,1], index: 7, kind: input, shape index: {}]
  %s8 = inlined_call_operand.hbm [shape: f32[2,8,128], index: 8, kind: output, shape index: {}]
  %s9 = sld [smem:[#allocation0]]
  $region129: #{tpu_custom_call.1} parent=0
    _
  %s11 = ssub.s32 1, %s9
  %s12 = scalar_select 0, %s11, %s9
  $region1: #{tpu_custom_call.1} parent=0
    #allocation4 [shape = 'u8[8192]{0}', space=vmem, size = 0x2000, scoped, tag = 'output window, operand 0']
    #allocation5 [shape = 's32[2]{0}', space=sflag, size = 0x8, scoped, tag = 'scoped memory for tpu_custom_call.1']
    %13 = vsyncpa [#allocation5], 0
    %s14 = scalar_lea.sflag [#allocation5], 1
    %15 = vsyncpa %s14, 0
    loop: start=0, step=1, limit=4
    $region2: #{tpu_custom_call.1} parent=1 // loop_pre_header
      _
    $region3: #{tpu_custom_call.1} parent=1 // loop_header
      %s17 = sphi 0, %s21
      %p18 = scmp.ge.s32.totalorder %s17, 4
      %s24 = sphi 0, %s36
      %s25 = sphi 0, %s32
      %s26 = sphi 0, %s24
      %s27 = sphi 0, %s25
      %s28 = sphi 0, %s26
      %s29 = sphi 0, %s27
      %s41 = sphi 0, %s43
      %s44 = sphi 0, %s41
      %s45 = sphi 0, %s44
      %s61 = sphi 0, %s45
      %s65 = sphi 0, %s65
      %s67 = sphi 0, %s65
      %s68 = sphi 0, %s67
      %s82 = sphi 0, %s68
      %s86 = sphi 0, %s86
      %s88 = sphi 0, %s86
      %s89 = sphi 0, %s88
      %s103 = sphi 0, %s89
      %s107 = sphi 0, %s107
      %s109 = sphi 0, %s107
      %s110 = sphi 0, %s109
      %s124 = sphi 0, %s110
      %s128 = sphi 0, %s128
      %s130 = sphi 0, %s128
      %s131 = sphi 0, %s130
      %s145 = sphi 0, %s131
      %s149 = sphi 0, %s149
      %s151 = sphi 0, %s149
      %s152 = sphi 0, %s151
      %s166 = sphi 0, %s152
      %s170 = sphi 0, %s170
      %s172 = sphi 0, %s170
      %s173 = sphi 0, %s172
      %s187 = sphi 0, %s173
      %s195 = sphi 0, %s197
      %s198 = sphi 0, %s195
      %s199 = sphi 0, %s198
      %s215 = sphi 0, %s199
    $region4: #{tpu_custom_call.1} parent=1 // loop_header_branch
      %20 = sbr.rel (%p18) target = $region8
    $region5: #{tpu_custom_call.1} parent=1 // loop_body
      %s22 = ssub.s32 %s17, 1
      %s23 = ssub.s32 %s17, 2
      %s30 = sadd.s32 1, %s25
      %p31 = scmp.ge.s32.totalorder %s30, 1
      %s32 = scalar_select %p31, 0, %s30
      %s33 = sadd.s32 1, %s24
      %s34 = scalar_select %p31, %s33, %s24
      %p35 = scmp.ge.s32.totalorder %s34, 2
      %s36 = scalar_select %p35, 0, %s34
      %s37 = ssub.s32 %s24, %s36
      %s38 = ssub.s32 %s25, %s32
      %s39 = sor.u32 %s37, %s38
      %p40 = scmp.eq.s32.totalorder %s39, 0
      %s42 = sadd.s32 %s41, 1
      %s43 = scalar_select %p40, %s41, %s42
      %p46 = pneg %p40
      %p47 = scmp.eq.s32.totalorder %s17, 1
      %p48 = por %p46, %p47
      %p49 = scmp.ne.s32.totalorder %s41, %s44
      %p50 = scmp.eq.s32.totalorder %s17, 0
      %p51 = por %p49, %p50
      %p52 = scmp.ne.s32.totalorder %s41, %s44
      %p53 = scmp.eq.s32.totalorder %s22, 1
      %p54 = por %p52, %p53
      %p55 = scmp.ne.s32.totalorder %s44, %s45
      %p56 = scmp.eq.s32.totalorder %s22, 0
      %p57 = por %p55, %p56
      %p58 = scmp.ne.s32.totalorder %s44, %s45
      %p59 = scmp.eq.s32.totalorder %s23, 1
      %p60 = por %p58, %p59
      %p62 = scmp.ne.s32.totalorder %s45, %s61
      %p63 = scmp.eq.s32.totalorder %s23, 0
      %p64 = por %p62, %p63
      %s66 = sadd.s32 %s65, 1
      %p69 = scmp.eq.s32.totalorder %s17, 1
      %p70 = scmp.ne.s32.totalorder %s65, %s67
      %p71 = scmp.eq.s32.totalorder %s17, 0
      %p72 = por %p70, %p71
      %p73 = scmp.ne.s32.totalorder %s65, %s67
      %p74 = scmp.eq.s32.totalorder %s22, 1
      %p75 = por %p73, %p74
      %p76 = scmp.ne.s32.totalorder %s67, %s68
      %p77 = scmp.eq.s32.totalorder %s22, 0
      %p78 = por %p76, %p77
      %p79 = scmp.ne.s32.totalorder %s67, %s68
      %p80 = scmp.eq.s32.totalorder %s23, 1
      %p81 = por %p79, %p80
      %p83 = scmp.ne.s32.totalorder %s68, %s82
      %p84 = scmp.eq.s32.totalorder %s23, 0
      %p85 = por %p83, %p84
      %s87 = sadd.s32 %s86, 1
      %p90 = scmp.eq.s32.totalorder %s17, 1
      %p91 = scmp.ne.s32.totalorder %s86, %s88
      %p92 = scmp.eq.s32.totalorder %s17, 0
      %p93 = por %p91, %p92
      %p94 = scmp.ne.s32.totalorder %s86, %s88
      %p95 = scmp.eq.s32.totalorder %s22, 1
      %p96 = por %p94, %p95
      %p97 = scmp.ne.s32.totalorder %s88, %s89
      %p98 = scmp.eq.s32.totalorder %s22, 0
      %p99 = por %p97, %p98
      %p100 = scmp.ne.s32.totalorder %s88, %s89
      %p101 = scmp.eq.s32.totalorder %s23, 1
      %p102 = por %p100, %p101
      %p104 = scmp.ne.s32.totalorder %s89, %s103
      %p105 = scmp.eq.s32.totalorder %s23, 0
      %p106 = por %p104, %p105
      %s108 = sadd.s32 %s107, 1
      %p111 = scmp.eq.s32.totalorder %s17, 1
      %p112 = scmp.ne.s32.totalorder %s107, %s109
      %p113 = scmp.eq.s32.totalorder %s17, 0
      %p114 = por %p112, %p113
      %p115 = scmp.ne.s32.totalorder %s107, %s109
      %p116 = scmp.eq.s32.totalorder %s22, 1
      %p117 = por %p115, %p116
      %p118 = scmp.ne.s32.totalorder %s109, %s110
      %p119 = scmp.eq.s32.totalorder %s22, 0
      %p120 = por %p118, %p119
      %p121 = scmp.ne.s32.totalorder %s109, %s110
      %p122 = scmp.eq.s32.totalorder %s23, 1
      %p123 = por %p121, %p122
      %p125 = scmp.ne.s32.totalorder %s110, %s124
      %p126 = scmp.eq.s32.totalorder %s23, 0
      %p127 = por %p125, %p126
      %s129 = sadd.s32 %s128, 1
      %p132 = scmp.eq.s32.totalorder %s17, 1
      %p133 = scmp.ne.s32.totalorder %s128, %s130
      %p134 = scmp.eq.s32.totalorder %s17, 0
      %p135 = por %p133, %p134
      %p136 = scmp.ne.s32.totalorder %s128, %s130
      %p137 = scmp.eq.s32.totalorder %s22, 1
      %p138 = por %p136, %p137
      %p139 = scmp.ne.s32.totalorder %s130, %s131
      %p140 = scmp.eq.s32.totalorder %s22, 0
      %p141 = por %p139, %p140
      %p142 = scmp.ne.s32.totalorder %s130, %s131
      %p143 = scmp.eq.s32.totalorder %s23, 1
      %p144 = por %p142, %p143
      %p146 = scmp.ne.s32.totalorder %s131, %s145
      %p147 = scmp.eq.s32.totalorder %s23, 0
      %p148 = por %p146, %p147
      %s150 = sadd.s32 %s149, 1
      %p153 = scmp.eq.s32.totalorder %s17, 1
      %p154 = scmp.ne.s32.totalorder %s149, %s151
      %p155 = scmp.eq.s32.totalorder %s17, 0
      %p156 = por %p154, %p155
      %p157 = scmp.ne.s32.totalorder %s149, %s151
      %p158 = scmp.eq.s32.totalorder %s22, 1
      %p159 = por %p157, %p158
      %p160 = scmp.ne.s32.totalorder %s151, %s152
      %p161 = scmp.eq.s32.totalorder %s22, 0
      %p162 = por %p160, %p161
      %p163 = scmp.ne.s32.totalorder %s151, %s152
      %p164 = scmp.eq.s32.totalorder %s23, 1
      %p165 = por %p163, %p164
      %p167 = scmp.ne.s32.totalorder %s152, %s166
      %p168 = scmp.eq.s32.totalorder %s23, 0
      %p169 = por %p167, %p168
      %s171 = sadd.s32 %s170, 1
      %p174 = scmp.eq.s32.totalorder %s17, 1
      %p175 = scmp.ne.s32.totalorder %s170, %s172
      %p176 = scmp.eq.s32.totalorder %s17, 0
      %p177 = por %p175, %p176
      %p178 = scmp.ne.s32.totalorder %s170, %s172
      %p179 = scmp.eq.s32.totalorder %s22, 1
      %p180 = por %p178, %p179
      %p181 = scmp.ne.s32.totalorder %s172, %s173
      %p182 = scmp.eq.s32.totalorder %s22, 0
      %p183 = por %p181, %p182
      %p184 = scmp.ne.s32.totalorder %s172, %s173
      %p185 = scmp.eq.s32.totalorder %s23, 1
      %p186 = por %p184, %p185
      %p188 = scmp.ne.s32.totalorder %s173, %s187
      %p189 = scmp.eq.s32.totalorder %s23, 0
      %p190 = por %p188, %p189
      %s191 = ssub.s32 %s24, %s36
      %s192 = ssub.s32 %s25, %s32
      %s193 = sor.u32 %s191, %s192
      %p194 = scmp.eq.s32.totalorder %s193, 0
      %s196 = sadd.s32 %s195, 1
      %s197 = scalar_select %p194, %s195, %s196
      %p200 = pneg %p194
      %p201 = scmp.eq.s32.totalorder %s17, 1
      %p202 = por %p200, %p201
      %p203 = scmp.ne.s32.totalorder %s195, %s198
      %p204 = scmp.eq.s32.totalorder %s17, 0
      %p205 = por %p203, %p204
      %p206 = scmp.ne.s32.totalorder %s195, %s198
      %p207 = scmp.eq.s32.totalorder %s22, 1
      %p208 = por %p206, %p207
      %p209 = scmp.ne.s32.totalorder %s198, %s199
      %p210 = scmp.eq.s32.totalorder %s22, 0
      %p211 = por %p209, %p210
      %p212 = scmp.ne.s32.totalorder %s198, %s199
      %p213 = scmp.eq.s32.totalorder %s23, 1
      %p214 = por %p212, %p213
      %p216 = scmp.ne.s32.totalorder %s199, %s215
      %p217 = scmp.eq.s32.totalorder %s23, 0
      %p218 = por %p216, %p217
      %p219 = scmp.le.s32.totalorder 1, %s17
      %p220 = scmp.lt.s32.totalorder %s17, 3
      %p221 = pnand %p219, %p220
      %p222 = pneg %p221
      // Predicated region
      $region9: #{tpu_custom_call.1} parent=5 // pred_check
        _
      $region10: #{tpu_custom_call.1} parent=5 // pred_check_branch
        %224 = sbr.rel (%p221) target = $region12
      $region11: #{tpu_custom_call.1} parent=5 // pred_region
        %s225 = ssub.s32 %s17, 1
        // Predicated region
        $region13: #{tpu_custom_call.1} parent=11 // pred_check
          %p226 = pneg %p78
        $region14: #{tpu_custom_call.1} parent=11 // pred_check_branch
          %228 = sbr.rel (%p226) target = $region16
        $region15: #{tpu_custom_call.1} parent=11 // pred_region
          _
        $region16: #{tpu_custom_call.1} parent=11 // pred_fallthru
          _
        // Predicated region
        $region17: #{tpu_custom_call.1} parent=11 // pred_check
          %p229 = pneg %p99
        $region18: #{tpu_custom_call.1} parent=11 // pred_check_branch
          %231 = sbr.rel (%p229) target = $region20
        $region19: #{tpu_custom_call.1} parent=11 // pred_region
          _
        $region20: #{tpu_custom_call.1} parent=11 // pred_fallthru
          _
        // Predicated region
        $region21: #{tpu_custom_call.1} parent=11 // pred_check
          %p232 = pneg %p120
        $region22: #{tpu_custom_call.1} parent=11 // pred_check_branch
          %234 = sbr.rel (%p232) target = $region24
        $region23: #{tpu_custom_call.1} parent=11 // pred_region
          _
        $region24: #{tpu_custom_call.1} parent=11 // pred_fallthru
          _
        // Predicated region
        $region25: #{tpu_custom_call.1} parent=11 // pred_check
          %p235 = pneg %p141
        $region26: #{tpu_custom_call.1} parent=11 // pred_check_branch
          %237 = sbr.rel (%p235) target = $region28
        $region27: #{tpu_custom_call.1} parent=11 // pred_region
          _
        $region28: #{tpu_custom_call.1} parent=11 // pred_fallthru
          _
        // Predicated region
        $region29: #{tpu_custom_call.1} parent=11 // pred_check
          %p238 = pneg %p162
        $region30: #{tpu_custom_call.1} parent=11 // pred_check_branch
          %240 = sbr.rel (%p238) target = $region32
        $region31: #{tpu_custom_call.1} parent=11 // pred_region
          _
        $region32: #{tpu_custom_call.1} parent=11 // pred_fallthru
          _
        // Predicated region
        $region33: #{tpu_custom_call.1} parent=11 // pred_check
          %p241 = pneg %p183
        $region34: #{tpu_custom_call.1} parent=11 // pred_check_branch
          %243 = sbr.rel (%p241) target = $region36
        $region35: #{tpu_custom_call.1} parent=11 // pred_region
          _
        $region36: #{tpu_custom_call.1} parent=11 // pred_fallthru
          _
      $region12: #{tpu_custom_call.1} parent=5 // pred_fallthru
        _
      %p244 = scmp.lt.s32.totalorder %s17, 2
      // Predicated region
      $region37: #{tpu_custom_call.1} parent=5 // pred_check
        %p245 = pneg %p244
      $region38: #{tpu_custom_call.1} parent=5 // pred_check_branch
        %247 = sbr.rel (%p245) target = $region40
      $region39: #{tpu_custom_call.1} parent=5 // pred_region
        // Predicated region
        $region41: #{tpu_custom_call.1} parent=39 // pred_check
          %p248 = pneg %p51
        $region42: #{tpu_custom_call.1} parent=39 // pred_check_branch
          %250 = sbr.rel (%p248) target = $region44
        $region43: #{tpu_custom_call.1} parent=39 // pred_region
          %p251 = scmp.lt.s32.totalorder %s24, 1
          %s252 = scalar_select %p251, %s24, 1
          %p253 = scmp.lt.s32.totalorder %s25, 0
          %s254 = scalar_select %p253, %s25, 0
          %s255 = sadd.s32 %s254, %s252
          %s256 = smul.addr %s255, 4
          %s257 = scalar_lea.vmem %s1, %s256
        $region44: #{tpu_custom_call.1} parent=39 // pred_fallthru
          _
      $region40: #{tpu_custom_call.1} parent=5 // pred_fallthru
        _
      %p258 = scmp.le.s32.totalorder 1, %s17
      %p259 = scmp.lt.s32.totalorder %s17, 3
      %p260 = pnand %p258, %p259
      %p261 = pneg %p260
      // Predicated region
      $region45: #{tpu_custom_call.1} parent=5 // pred_check
        _
      $region46: #{tpu_custom_call.1} parent=5 // pred_check_branch
        %263 = sbr.rel (%p260) target = $region48
      $region47: #{tpu_custom_call.1} parent=5 // pred_region
        %s264 = ssub.s32 %s17, 1
        %p265 = scmp.lt.s32.totalorder %s26, 1
        %s266 = scalar_select %p265, %s26, 1
        %p267 = scmp.lt.s32.totalorder %s27, 0
        %s268 = scalar_select %p267, %s27, 0
        %s269 = sadd.s32 %s268, %s266
        %s270 = smul.addr %s269, 4
        %s271 = scalar_lea.vmem %s1, %s270
        %p272 = pneg %p57
        %p273 = pneg %p54
        %p274 = pneg %p78
        %p275 = pneg %p75
        %p276 = pneg %p99
        %p277 = pneg %p96
        %p278 = pneg %p120
        %p279 = pneg %p117
        %p280 = pneg %p141
        %p281 = pneg %p138
        %p282 = pneg %p162
        %p283 = pneg %p159
        %p284 = pneg %p183
        %p285 = pneg %p180
        %p286 = pneg %p211
        %p287 = pneg %p208
        %s288 = sand.u32 %s198, 1
        %s289 = scalar_lea.sflag [#allocation5], %s288
        %s290 = sand.u32 %s198, 1
        %s291 = smul.addr %s290, 8
        %s292 = scalar_lea.vmem [#allocation4], %s291
        %p293 = scmp.lt.s32.totalorder %s26, 1
        %s294 = scalar_select %p293, %s26, 1
        %p295 = scmp.lt.s32.totalorder %s27, 0
        %s296 = scalar_select %p295, %s27, 0
        %s297 = sadd.s32 %s296, %s294
        %s298 = smul.addr %s297, 4
        %s299 = scalar_lea.vmem %s1, %s298
        %p301 = scmp.lt.s32.totalorder %s27, 0
        %s302 = ssub.s32 0, %s27
        %s303 = scalar_select %p301, %s302, %s27
        %s304 = sand.u32 %s303, 1
        %s305 = ssub.s32 0, %s304
        %s306 = scalar_select %p301, %s305, %s304
        %p307 = scmp.ne.s32.totalorder %s306, 0
        %p308 = scmp.lt.s32.totalorder %s306, 0
        %p309 = pnand %p308, %p307
        %p310 = pneg %p309
        %s311 = sadd.s32 %s306, 2
        %s312 = scalar_select %p310, %s311, %s306
        %p313 = scmp.eq.s32.totalorder %s27, 0
        // Predicated region
        $region49: #{tpu_custom_call.1} parent=47 // pred_check
          %p314 = pneg %p313
        $region50: #{tpu_custom_call.1} parent=47 // pred_check_branch
          %316 = sbr.rel (%p314) target = $region52
        $region51: #{tpu_custom_call.1} parent=47 // pred_region
          %s317 = smul.u32 %s27, 128
          %s318 = sshra.s32 %s317, 7
          %s319 = sand.u32 %s317, 127
          %s320 = smul.u32 %s26, 2
          %s321 = sadd.s32 %s318, %s320
          %s322 = smul.addr %s321, 2
          %s323 = scalar_lea.vmem %s0, %s322
          %p325 = scmp.lt.u32.totalorder 4, 8
          %p326 = pneg %p325
          // Predicated region
          $region53: #{tpu_custom_call.1} parent=51 // pred_check
            _
          $region54: #{tpu_custom_call.1} parent=51 // pred_check_branch
            %328 = sbr.rel (%p325) target = $region56
          $region55: #{tpu_custom_call.1} parent=51 // pred_region
            %s344 = sand.u32 4, 7
            %p345 = scmp.eq.s32.totalorder %s344, 0
            %p346 = pneg %p345
            // Predicated region
            $region68: #{tpu_custom_call.1} parent=55 // pred_check
              _
            $region69: #{tpu_custom_call.1} parent=55 // pred_check_branch
              %348 = sbr.rel (%p345) target = $region71
            $region70: #{tpu_custom_call.1} parent=55 // pred_region
              %s349 = sand.u32 4, 7
              %s350 = ssub.s32 4, %s349
              %s351 = scalar_lea.vmem %s323, %s350
              %s352 = ssub.s32 4, %s349
              %s353 = scalar_lea.vmem [#allocation2], %s352
              %s354 = sshll.u32 1, %s349
              %s355 = ssub.s32 %s354, 1
              loop: start=0, step=1, limit=1
              $region72: #{tpu_custom_call.1} parent=70 // loop_pre_header
                _
              $region73: #{tpu_custom_call.1} parent=70 // loop_header
                %s357 = sphi 0, %s361
                %p358 = scmp.ge.s32.totalorder %s357, 1
                %s362 = sphi %s351, %s351
                %s363 = sphi %s353, %s353
              $region74: #{tpu_custom_call.1} parent=70 // loop_header_branch
                %360 = sbr.rel (%p358) target = $region78
              $region75: #{tpu_custom_call.1} parent=70 // loop_body
                %v364 = vld [vmem:[%s362] sm:%s355]
                %365 = vst [vmem:[%s363] sm:%s355] %v364
              $region76: #{tpu_custom_call.1} parent=70 // loop_footer
                %s361 = sadd.s32 1, %s357
              $region77: #{tpu_custom_call.1} parent=70 // loop_footer_branch
                %356 = sbr.rel target = $region73
              $region78: #{tpu_custom_call.1} parent=70 // loop_exit
                _
            $region71: #{tpu_custom_call.1} parent=55 // pred_fallthru
              _
          $region56: #{tpu_custom_call.1} parent=51 // pred_fallthru
            _
          // Predicated region
          $region57: #{tpu_custom_call.1} parent=51 // pred_check
            %p329 = pneg %p325
          $region58: #{tpu_custom_call.1} parent=51 // pred_check_branch
            %331 = sbr.rel (%p329) target = $region60
          $region59: #{tpu_custom_call.1} parent=51 // pred_region
            %s332 = sshll.u32 1, 4
            %s333 = ssub.s32 %s332, 1
            loop: start=0, step=1, limit=1
            $region61: #{tpu_custom_call.1} parent=59 // loop_pre_header
              _
            $region62: #{tpu_custom_call.1} parent=59 // loop_header
              %s335 = sphi 0, %s339
              %p336 = scmp.ge.s32.totalorder %s335, 1
              %s340 = sphi %s323, %s323
              %s341 = sphi [#allocation2], [#allocation2]
            $region63: #{tpu_custom_call.1} parent=59 // loop_header_branch
              %338 = sbr.rel (%p336) target = $region67
            $region64: #{tpu_custom_call.1} parent=59 // loop_body
              %v342 = vld [vmem:[%s340] sm:%s333]
              %343 = vst [vmem:[%s341] sm:%s333] %v342
            $region65: #{tpu_custom_call.1} parent=59 // loop_footer
              %s339 = sadd.s32 1, %s335
            $region66: #{tpu_custom_call.1} parent=59 // loop_footer_branch
              %334 = sbr.rel target = $region62
            $region67: #{tpu_custom_call.1} parent=59 // loop_exit
              _
          $region60: #{tpu_custom_call.1} parent=51 // pred_fallthru
            _
          // Predicated region
          $region79: #{tpu_custom_call.1} parent=51 // pred_check
            _
          $region80: #{tpu_custom_call.1} parent=51 // pred_check_branch
            %368 = sbr.rel (0) target = $region82
          $region81: #{tpu_custom_call.1} parent=51 // pred_region
            %369 = vsyncadd [#allocation3], 64
          $region82: #{tpu_custom_call.1} parent=51 // pred_fallthru
            _
        $region52: #{tpu_custom_call.1} parent=47 // pred_fallthru
          _
        %s370 = smul.u32 %s27, 128
        %s371 = smul.u32 %s312, 2
        %s372 = smul.addr %s371, 2
        %s373 = scalar_lea.vmem [#allocation2], %s372
        %s374 = scalar_lea.sflag [#allocation3], %s312
        %s375 = smul.u32 2, 1
        %s376 = smul.u32 %s375, 2
        %s377 = sshll.u32 %s376, 4
        %378 = dma.done %s374, %s377
        %s379 = sadd.s32 %s27, 1
        %p380 = scmp.lt.s32.totalorder %s379, 1
        // Predicated region
        $region83: #{tpu_custom_call.1} parent=47 // pred_check
          %p381 = pneg %p380
        $region84: #{tpu_custom_call.1} parent=47 // pred_check_branch
          %383 = sbr.rel (%p381) target = $region86
        $region85: #{tpu_custom_call.1} parent=47 // pred_region
          %s384 = ssub.s32 1, %s312
          %s385 = smul.u32 %s379, 128
          %s386 = sshra.s32 %s385, 7
          %s387 = sand.u32 %s385, 127
          %s388 = smul.u32 %s26, 2
          %s389 = sadd.s32 %s386, %s388
          %s390 = smul.addr %s389, 2
          %s391 = scalar_lea.vmem %s0, %s390
          %s392 = smul.u32 %s384, 2
          %s393 = smul.addr %s392, 2
          %s394 = scalar_lea.vmem [#allocation2], %s393
          %s395 = scalar_lea.sflag [#allocation3], %s384
          %p397 = scmp.lt.u32.totalorder 4, 8
          %p398 = pneg %p397
          // Predicated region
          $region87: #{tpu_custom_call.1} parent=85 // pred_check
            _
          $region88: #{tpu_custom_call.1} parent=85 // pred_check_branch
            %400 = sbr.rel (%p397) target = $region90
          $region89: #{tpu_custom_call.1} parent=85 // pred_region
            %s416 = sand.u32 4, 7
            %p417 = scmp.eq.s32.totalorder %s416, 0
            %p418 = pneg %p417
            // Predicated region
            $region102: #{tpu_custom_call.1} parent=89 // pred_check
              _
            $region103: #{tpu_custom_call.1} parent=89 // pred_check_branch
              %420 = sbr.rel (%p417) target = $region105
            $region104: #{tpu_custom_call.1} parent=89 // pred_region
              %s421 = sand.u32 4, 7
              %s422 = ssub.s32 4, %s421
              %s423 = scalar_lea.vmem %s391, %s422
              %s424 = ssub.s32 4, %s421
              %s425 = scalar_lea.vmem %s394, %s424 [#allocation2]
              %s426 = sshll.u32 1, %s421
              %s427 = ssub.s32 %s426, 1
              loop: start=0, step=1, limit=1
              $region106: #{tpu_custom_call.1} parent=104 // loop_pre_header
                _
              $region107: #{tpu_custom_call.1} parent=104 // loop_header
                %s429 = sphi 0, %s433
                %p430 = scmp.ge.s32.totalorder %s429, 1
                %s434 = sphi %s423, %s423
                %s435 = sphi %s425, %s425
              $region108: #{tpu_custom_call.1} parent=104 // loop_header_branch
                %432 = sbr.rel (%p430) target = $region112
              $region109: #{tpu_custom_call.1} parent=104 // loop_body
                %v436 = vld [vmem:[%s434] sm:%s427]
                %437 = vst [vmem:[%s435] sm:%s427] %v436
              $region110: #{tpu_custom_call.1} parent=104 // loop_footer
                %s433 = sadd.s32 1, %s429
              $region111: #{tpu_custom_call.1} parent=104 // loop_footer_branch
                %428 = sbr.rel target = $region107
              $region112: #{tpu_custom_call.1} parent=104 // loop_exit
                _
            $region105: #{tpu_custom_call.1} parent=89 // pred_fallthru
              _
          $region90: #{tpu_custom_call.1} parent=85 // pred_fallthru
            _
          // Predicated region
          $region91: #{tpu_custom_call.1} parent=85 // pred_check
            %p401 = pneg %p397
          $region92: #{tpu_custom_call.1} parent=85 // pred_check_branch
            %403 = sbr.rel (%p401) target = $region94
          $region93: #{tpu_custom_call.1} parent=85 // pred_region
            %s404 = sshll.u32 1, 4
            %s405 = ssub.s32 %s404, 1
            loop: start=0, step=1, limit=1
            $region95: #{tpu_custom_call.1} parent=93 // loop_pre_header
              _
            $region96: #{tpu_custom_call.1} parent=93 // loop_header
              %s407 = sphi 0, %s411
              %p408 = scmp.ge.s32.totalorder %s407, 1
              %s412 = sphi %s391, %s391
              %s413 = sphi %s394, %s394
            $region97: #{tpu_custom_call.1} parent=93 // loop_header_branch
              %410 = sbr.rel (%p408) target = $region101
            $region98: #{tpu_custom_call.1} parent=93 // loop_body
              %v414 = vld [vmem:[%s412] sm:%s405]
              %415 = vst [vmem:[%s413] sm:%s405] %v414
            $region99: #{tpu_custom_call.1} parent=93 // loop_footer
              %s411 = sadd.s32 1, %s407
            $region100: #{tpu_custom_call.1} parent=93 // loop_footer_branch
              %406 = sbr.rel target = $region96
            $region101: #{tpu_custom_call.1} parent=93 // loop_exit
              _
          $region94: #{tpu_custom_call.1} parent=85 // pred_fallthru
            _
          // Predicated region
          $region113: #{tpu_custom_call.1} parent=85 // pred_check
            _
          $region114: #{tpu_custom_call.1} parent=85 // pred_check_branch
            %440 = sbr.rel (0) target = $region116
          $region115: #{tpu_custom_call.1} parent=85 // pred_region
            %441 = vsyncadd %s395, 64
          $region116: #{tpu_custom_call.1} parent=85 // pred_fallthru
            _
        $region86: #{tpu_custom_call.1} parent=47 // pred_fallthru
          _
        %v442 = vld [vmem:[%s373] sm:$0xf]
        %v443 = vld [vmem:[%s2] sm:$0xf]
        %s444 = scalar_lea.vmem %s2, 4
        %v445 = vld [vmem:[%s444] sm:$0xf]
        %v448 = vunpack.c.l.s4 1983009808
        %v449 = vunpack.c.0.s8 %v448
        %v450 = vlaneseq
        %v451 = vshrl.u32 %v450, 7
        %v452 = vsub.s32 %v449, %v451
        %v453 = vrot.slane %v442, %v452
        %v454 = vcombine.high %v453, %v453
        %455 = vrot.lane.b32.xlu0 %v453, 126
        %v456 = vpop.permute.xlu0 %455
        %457 = vrot.lane.b32.xlu0 %v454, 126
        %v458 = vpop.permute.xlu0 %457
        %vm459 = vcmask 1031168
        %v460 = vsel %vm459, %v456, %v458
        %vm461 = vcmask 31744
        %v463 = vsel %vm461, %v445, 0
        %vm465 = vcmask 1041408
        %v467 = vsel %vm465, %v460, 0
        %v470 = vsel %vm465, %v458, 0
        %472 = vmatprep.subr.bf16.mxu0 0
        %473 = vmatpush1.bf16.msra.mxu0 0
        %474 = vmatprep.subr.bf16.mxu0 0
        %475 = vmatpush1.bf16.msra.mxu0 0
        %476 = vmatprep.subr.bf16.mxu0 0
        %477 = vmatpush1.bf16.msra.mxu0 0
        %478 = vmatprep.subr.bf16.mxu0 0
        %479 = vmatpush1.bf16.msra.mxu0 0
        %480 = vmatprep.subr.bf16.mxu0 0
        %481 = vmatpush1.bf16.msra.mxu0 0
        %482 = vmatprep.subr.bf16.mxu0 0
        %483 = vmatpush1.bf16.msra.mxu0 0
        %484 = vmatprep.subr.bf16.mxu0 0
        %485 = vmatpush1.bf16.msra.mxu0 0
        %486 = vmatprep.subr.bf16.mxu0 %v470
        %487 = vmatpush1.bf16.msra.mxu0 %v467
        %488 = vmatprep.subr.bf16.mxu0 0
        %489 = vmatpush2.bf16.msra.mxu0 0
        %490 = vmatprep.subr.bf16.mxu0 0
        %491 = vmatpush2.bf16.msra.mxu0 0
        %492 = vmatprep.subr.bf16.mxu0 0
        %493 = vmatpush2.bf16.msra.mxu0 0
        %494 = vmatprep.subr.bf16.mxu0 0
        %495 = vmatpush2.bf16.msra.mxu0 0
        %496 = vmatprep.subr.bf16.mxu0 0
        %497 = vmatpush2.bf16.msra.mxu0 0
        %498 = vmatprep.subr.bf16.mxu0 0
        %499 = vmatpush2.bf16.msra.mxu0 0
        %500 = vmatprep.subr.bf16.mxu0 0
        %501 = vmatpush2.bf16.msra.mxu0 0
        %502 = vmatprep.subr.bf16.mxu0 0
        %503 = vmatpush2.bf16.msra.mxu0 0
        %504 = vmatprep.mubr.bf16.mxu0 0
        %505 = vmatmul.mubr.bf16.gmra.mxu0 %v463
        %v506 = vpop.f32.mrf.mxu0
        %v507 = vadd.f32 0.0, %v506
        %v508 = vpop.f32.mrf.mxu0
        %v509 = vadd.f32 0.0, %v508
        %v510 = vpop.f32.mrf.mxu0
        %v511 = vpop.f32.mrf.mxu0
        %512 = vdwg.mxu0
        %v514 = vsel %vm461, %v443, 0
        %v517 = vsel %vm465, %v453, 0
        %v520 = vsel %vm465, %v454, 0
        %522 = vmatprep.subr.bf16.mxu0 0
        %523 = vmatpush1.bf16.msra.mxu0 0
        %524 = vmatprep.subr.bf16.mxu0 0
        %525 = vmatpush1.bf16.msra.mxu0 0
        %526 = vmatprep.subr.bf16.mxu0 0
        %527 = vmatpush1.bf16.msra.mxu0 0
        %528 = vmatprep.subr.bf16.mxu0 0
        %529 = vmatpush1.bf16.msra.mxu0 0
        %530 = vmatprep.subr.bf16.mxu0 0
        %531 = vmatpush1.bf16.msra.mxu0 0
        %532 = vmatprep.subr.bf16.mxu0 0
        %533 = vmatpush1.bf16.msra.mxu0 0
        %534 = vmatprep.subr.bf16.mxu0 0
        %535 = vmatpush1.bf16.msra.mxu0 0
        %536 = vmatprep.subr.bf16.mxu0 %v520
        %537 = vmatpush1.bf16.msra.mxu0 %v517
        %538 = vmatprep.subr.bf16.mxu0 0
        %539 = vmatpush2.bf16.msra.mxu0 0
        %540 = vmatprep.subr.bf16.mxu0 0
        %541 = vmatpush2.bf16.msra.mxu0 0
        %542 = vmatprep.subr.bf16.mxu0 0
        %543 = vmatpush2.bf16.msra.mxu0 0
        %544 = vmatprep.subr.bf16.mxu0 0
        %545 = vmatpush2.bf16.msra.mxu0 0
        %546 = vmatprep.subr.bf16.mxu0 0
        %547 = vmatpush2.bf16.msra.mxu0 0
        %548 = vmatprep.subr.bf16.mxu0 0
        %549 = vmatpush2.bf16.msra.mxu0 0
        %550 = vmatprep.subr.bf16.mxu0 0
        %551 = vmatpush2.bf16.msra.mxu0 0
        %552 = vmatprep.subr.bf16.mxu0 0
        %553 = vmatpush2.bf16.msra.mxu0 0
        %554 = vmatprep.mubr.bf16.mxu0 0
        %555 = vmatmul.mubr.bf16.gmra.mxu0 %v514
        %v556 = vpop.f32.mrf.mxu0
        %v557 = vadd.f32 %v507, %v556
        %v558 = vpop.f32.mrf.mxu0
        %v559 = vadd.f32 %v509, %v558
        %v560 = vpop.f32.mrf.mxu0
        %v561 = vpop.f32.mrf.mxu0
        %562 = vdwg.mxu0
        %s563 = scalar_lea.vmem %s2, 8
        %v564 = vld [vmem:[%s563] sm:$0xf]
        %565 = vrot.lane.b32.xlu0 %v453, 124
        %v566 = vpop.permute.xlu0 %565
        %567 = vrot.lane.b32.xlu0 %v454, 124
        %v568 = vpop.permute.xlu0 %567
        %vm569 = vcmask 1014784
        %v570 = vsel %vm569, %v566, %v568
        %v572 = vsel %vm461, %v564, 0
        %v575 = vsel %vm465, %v570, 0
        %v578 = vsel %vm465, %v568, 0
        %580 = vmatprep.subr.bf16.mxu0 0
        %581 = vmatpush1.bf16.msra.mxu0 0
        %582 = vmatprep.subr.bf16.mxu0 0
        %583 = vmatpush1.bf16.msra.mxu0 0
        %584 = vmatprep.subr.bf16.mxu0 0
        %585 = vmatpush1.bf16.msra.mxu0 0
        %586 = vmatprep.subr.bf16.mxu0 0
        %587 = vmatpush1.bf16.msra.mxu0 0
        %588 = vmatprep.subr.bf16.mxu0 0
        %589 = vmatpush1.bf16.msra.mxu0 0
        %590 = vmatprep.subr.bf16.mxu0 0
        %591 = vmatpush1.bf16.msra.mxu0 0
        %592 = vmatprep.subr.bf16.mxu0 0
        %593 = vmatpush1.bf16.msra.mxu0 0
        %594 = vmatprep.subr.bf16.mxu0 %v578
        %595 = vmatpush1.bf16.msra.mxu0 %v575
        %596 = vmatprep.subr.bf16.mxu0 0
        %597 = vmatpush2.bf16.msra.mxu0 0
        %598 = vmatprep.subr.bf16.mxu0 0
        %599 = vmatpush2.bf16.msra.mxu0 0
        %600 = vmatprep.subr.bf16.mxu0 0
        %601 = vmatpush2.bf16.msra.mxu0 0
        %602 = vmatprep.subr.bf16.mxu0 0
        %603 = vmatpush2.bf16.msra.mxu0 0
        %604 = vmatprep.subr.bf16.mxu0 0
        %605 = vmatpush2.bf16.msra.mxu0 0
        %606 = vmatprep.subr.bf16.mxu0 0
        %607 = vmatpush2.bf16.msra.mxu0 0
        %608 = vmatprep.subr.bf16.mxu0 0
        %609 = vmatpush2.bf16.msra.mxu0 0
        %610 = vmatprep.subr.bf16.mxu0 0
        %611 = vmatpush2.bf16.msra.mxu0 0
        %612 = vmatprep.mubr.bf16.mxu0 0
        %613 = vmatmul.mubr.bf16.gmra.mxu0 %v572
        %v614 = vpop.f32.mrf.mxu0
        %v615 = vadd.f32 0.0, %v614
        %v616 = vpop.f32.mrf.mxu0
        %v617 = vadd.f32 0.0, %v616
        %v618 = vpop.f32.mrf.mxu0
        %v619 = vpop.f32.mrf.mxu0
        %620 = vdwg.mxu0
        %v621 = vadd.f32 %v557, %v615
        %v622 = vadd.f32 %v559, %v617
        %v623 = vld [vmem:[%s3] sm:$0xff]
        %625 = vset.pattern.permute.xlu0 0
        %626 = vperm.xlu0 %625, %v623
        %v627 = vpop.permute.xlu0 %626
        %v629 = vadd.f32 %v621, %v627
        %v630 = vadd.f32 %v622, %v627
        %v631 = vmax.f32 %v629, 0.0
        %v632 = vmax.f32 %v630, 0.0
        %v633 = vlaneseq
        %v634 = vand.u32 %v633, 127
        %v635 = vadd.s32 %v634, 128
        %s636 = ssub.s32 %s370, 2
        %v637 = vstv %s636
        %v638 = vadd.s32 %v634, %v637
        %v639 = vadd.s32 %v635, %v637
        %vm640 = vcmp.ge.s32.totalorder %v638, 0
        %vm641 = vcmp.ge.s32.totalorder %v639, 0
        %vm642 = vcmp.lt.s32.totalorder %v638, 16
        %vm643 = vcmp.lt.s32.totalorder %v639, 16
        %vm644 = vmand %vm640, %vm642
        %vm645 = vmand %vm641, %vm643
        %v646 = vsel %vm644, %v631, 0.0
        %v647 = vsel %vm645, %v632, 0.0
        %v648 = vpack.c.bf16 %v646, %v646
        %v649 = vpack.c.bf16 %v647, %v647
        %v650 = vld [vmem:[%s4] sm:$0xf]
        %s651 = scalar_lea.vmem %s4, 4
        %v652 = vld [vmem:[%s651] sm:$0xf]
        %655 = vrot.lane.b32.xlu0 %v648, 126
        %v656 = vpop.permute.xlu0 %655
        %657 = vrot.lane.b32.xlu0 %v649, 126
        %v658 = vpop.permute.xlu0 %657
        %v659 = vsel %vm459, %v656, %v658
        %vm660 = vcmask 64512
        %v662 = vsel %vm660, %v652, 0
        %vm664 = vcmask 1043456
        %v666 = vsel %vm664, %v659, 0
        %668 = vmatprep.subr.bf16.mxu0 0
        %669 = vmatpush1.bf16.msra.mxu0 0
        %670 = vmatprep.subr.bf16.mxu0 0
        %671 = vmatpush1.bf16.msra.mxu0 0
        %672 = vmatprep.subr.bf16.mxu0 0
        %673 = vmatpush1.bf16.msra.mxu0 0
        %674 = vmatprep.subr.bf16.mxu0 0
        %675 = vmatpush1.bf16.msra.mxu0 0
        %676 = vmatprep.subr.bf16.mxu0 0
        %677 = vmatpush1.bf16.msra.mxu0 0
        %678 = vmatprep.subr.bf16.mxu0 0
        %679 = vmatpush1.bf16.msra.mxu0 0
        %680 = vmatprep.subr.bf16.mxu0 0
        %681 = vmatpush1.bf16.msra.mxu0 0
        %682 = vmatprep.subr.bf16.mxu0 0
        %683 = vmatpush1.bf16.msra.mxu0 %v666
        %684 = vmatprep.subr.bf16.mxu0 0
        %685 = vmatpush2.bf16.msra.mxu0 0
        %686 = vmatprep.subr.bf16.mxu0 0
        %687 = vmatpush2.bf16.msra.mxu0 0
        %688 = vmatprep.subr.bf16.mxu0 0
        %689 = vmatpush2.bf16.msra.mxu0 0
        %690 = vmatprep.subr.bf16.mxu0 0
        %691 = vmatpush2.bf16.msra.mxu0 0
        %692 = vmatprep.subr.bf16.mxu0 0
        %693 = vmatpush2.bf16.msra.mxu0 0
        %694 = vmatprep.subr.bf16.mxu0 0
        %695 = vmatpush2.bf16.msra.mxu0 0
        %696 = vmatprep.subr.bf16.mxu0 0
        %697 = vmatpush2.bf16.msra.mxu0 0
        %698 = vmatprep.subr.bf16.mxu0 0
        %699 = vmatpush2.bf16.msra.mxu0 0
        %700 = vmatprep.mubr.bf16.mxu0 0
        %701 = vmatmul.mubr.bf16.gmra.mxu0 %v662
        %v702 = vpop.f32.mrf.mxu0
        %v703 = vadd.f32 0.0, %v702
        %v704 = vpop.f32.mrf.mxu0
        %v705 = vpop.f32.mrf.mxu0
        %v706 = vpop.f32.mrf.mxu0
        %707 = vdwg.mxu0
        %v709 = vsel %vm660, %v650, 0
        %v712 = vsel %vm664, %v648, 0
        %714 = vmatprep.subr.bf16.mxu0 0
        %715 = vmatpush1.bf16.msra.mxu0 0
        %716 = vmatprep.subr.bf16.mxu0 0
        %717 = vmatpush1.bf16.msra.mxu0 0
        %718 = vmatprep.subr.bf16.mxu0 0
        %719 = vmatpush1.bf16.msra.mxu0 0
        %720 = vmatprep.subr.bf16.mxu0 0
        %721 = vmatpush1.bf16.msra.mxu0 0
        %722 = vmatprep.subr.bf16.mxu0 0
        %723 = vmatpush1.bf16.msra.mxu0 0
        %724 = vmatprep.subr.bf16.mxu0 0
        %725 = vmatpush1.bf16.msra.mxu0 0
        %726 = vmatprep.subr.bf16.mxu0 0
        %727 = vmatpush1.bf16.msra.mxu0 0
        %728 = vmatprep.subr.bf16.mxu0 0
        %729 = vmatpush1.bf16.msra.mxu0 %v712
        %730 = vmatprep.subr.bf16.mxu0 0
        %731 = vmatpush2.bf16.msra.mxu0 0
        %732 = vmatprep.subr.bf16.mxu0 0
        %733 = vmatpush2.bf16.msra.mxu0 0
        %734 = vmatprep.subr.bf16.mxu0 0
        %735 = vmatpush2.bf16.msra.mxu0 0
        %736 = vmatprep.subr.bf16.mxu0 0
        %737 = vmatpush2.bf16.msra.mxu0 0
        %738 = vmatprep.subr.bf16.mxu0 0
        %739 = vmatpush2.bf16.msra.mxu0 0
        %740 = vmatprep.subr.bf16.mxu0 0
        %741 = vmatpush2.bf16.msra.mxu0 0
        %742 = vmatprep.subr.bf16.mxu0 0
        %743 = vmatpush2.bf16.msra.mxu0 0
        %744 = vmatprep.subr.bf16.mxu0 0
        %745 = vmatpush2.bf16.msra.mxu0 0
        %746 = vmatprep.mubr.bf16.mxu0 0
        %747 = vmatmul.mubr.bf16.gmra.mxu0 %v709
        %v748 = vpop.f32.mrf.mxu0
        %v749 = vadd.f32 %v703, %v748
        %v750 = vpop.f32.mrf.mxu0
        %v751 = vpop.f32.mrf.mxu0
        %v752 = vpop.f32.mrf.mxu0
        %753 = vdwg.mxu0
        %s754 = scalar_lea.vmem %s4, 8
        %v755 = vld [vmem:[%s754] sm:$0xf]
        %756 = vrot.lane.b32.xlu0 %v648, 124
        %v757 = vpop.permute.xlu0 %756
        %758 = vrot.lane.b32.xlu0 %v649, 124
        %v759 = vpop.permute.xlu0 %758
        %v760 = vsel %vm569, %v757, %v759
        %v762 = vsel %vm660, %v755, 0
        %v765 = vsel %vm664, %v760, 0
        %767 = vmatprep.subr.bf16.mxu0 0
        %768 = vmatpush1.bf16.msra.mxu0 0
        %769 = vmatprep.subr.bf16.mxu0 0
        %770 = vmatpush1.bf16.msra.mxu0 0
        %771 = vmatprep.subr.bf16.mxu0 0
        %772 = vmatpush1.bf16.msra.mxu0 0
        %773 = vmatprep.subr.bf16.mxu0 0
        %774 = vmatpush1.bf16.msra.mxu0 0
        %775 = vmatprep.subr.bf16.mxu0 0
        %776 = vmatpush1.bf16.msra.mxu0 0
        %777 = vmatprep.subr.bf16.mxu0 0
        %778 = vmatpush1.bf16.msra.mxu0 0
        %779 = vmatprep.subr.bf16.mxu0 0
        %780 = vmatpush1.bf16.msra.mxu0 0
        %781 = vmatprep.subr.bf16.mxu0 0
        %782 = vmatpush1.bf16.msra.mxu0 %v765
        %783 = vmatprep.subr.bf16.mxu0 0
        %784 = vmatpush2.bf16.msra.mxu0 0
        %785 = vmatprep.subr.bf16.mxu0 0
        %786 = vmatpush2.bf16.msra.mxu0 0
        %787 = vmatprep.subr.bf16.mxu0 0
        %788 = vmatpush2.bf16.msra.mxu0 0
        %789 = vmatprep.subr.bf16.mxu0 0
        %790 = vmatpush2.bf16.msra.mxu0 0
        %791 = vmatprep.subr.bf16.mxu0 0
        %792 = vmatpush2.bf16.msra.mxu0 0
        %793 = vmatprep.subr.bf16.mxu0 0
        %794 = vmatpush2.bf16.msra.mxu0 0
        %795 = vmatprep.subr.bf16.mxu0 0
        %796 = vmatpush2.bf16.msra.mxu0 0
        %797 = vmatprep.subr.bf16.mxu0 0
        %798 = vmatpush2.bf16.msra.mxu0 0
        %799 = vmatprep.mubr.bf16.mxu0 0
        %800 = vmatmul.mubr.bf16.gmra.mxu0 %v762
        %v801 = vpop.f32.mrf.mxu0
        %v802 = vadd.f32 0.0, %v801
        %v803 = vpop.f32.mrf.mxu0
        %v804 = vpop.f32.mrf.mxu0
        %v805 = vpop.f32.mrf.mxu0
        %806 = vdwg.mxu0
        %v807 = vadd.f32 %v749, %v802
        %v808 = vld [vmem:[%s5] sm:$0xff]
        %810 = vset.pattern.permute.xlu0 0
        %811 = vperm.xlu0 %810, %v808
        %v812 = vpop.permute.xlu0 %811
        %v814 = vadd.f32 %v807, %v812
        %v815 = vmax.f32 %v814, 0.0
        %v816 = vld [vmem:[%s299] sm:$0xf]
        %v817 = vld [vmem:[%s6] sm:$0xff]
        %v818 = vld [vmem:[%s7] sm:$0xff]
        %820 = vset.pattern.permute.xlu0 0
        %821 = vperm.xlu0 %820, %v818
        %v822 = vpop.permute.xlu0 %821
        %v825 = vsel %vm461, %v817, 0
        %v828 = vsel %vm664, %v816, 0
        %830 = vmatprep.subr.mxu0 0.0
        %831 = vmatpush1.msra.mxu0 0.0
        %832 = vmatprep.subr.mxu0 0.0
        %833 = vmatpush1.msra.mxu0 0.0
        %834 = vmatprep.subr.mxu0 0.0
        %835 = vmatpush1.msra.mxu0 0.0
        %836 = vmatprep.subr.mxu0 0.0
        %837 = vmatpush1.msra.mxu0 0.0
        %838 = vmatprep.subr.mxu0 0.0
        %839 = vmatpush1.msra.mxu0 0.0
        %840 = vmatprep.subr.mxu0 0.0
        %841 = vmatpush1.msra.mxu0 0.0
        %842 = vmatprep.subr.mxu0 0.0
        %843 = vmatpush1.msra.mxu0 0.0
        %844 = vmatprep.subr.mxu0 0.0
        %845 = vmatpush1.msra.mxu0 0.0
        %846 = vmatprep.subr.mxu0 0.0
        %847 = vmatpush1.msra.mxu0 0.0
        %848 = vmatprep.subr.mxu0 0.0
        %849 = vmatpush1.msra.mxu0 0.0
        %850 = vmatprep.subr.mxu0 0.0
        %851 = vmatpush1.msra.mxu0 0.0
        %852 = vmatprep.subr.mxu0 0.0
        %853 = vmatpush1.msra.mxu0 0.0
        %854 = vmatprep.subr.mxu0 0.0
        %855 = vmatpush1.msra.mxu0 0.0
        %856 = vmatprep.subr.mxu0 0.0
        %857 = vmatpush1.msra.mxu0 0.0
        %858 = vmatprep.subr.mxu0 0.0
        %859 = vmatpush1.msra.mxu0 0.0
        %860 = vmatprep.subr.mxu0 0.0
        %861 = vmatpush1.msra.mxu0 %v828
        %862 = vmatprep.subr.mxu0 0.0
        %863 = vmatpush2.msra.mxu0 0.0
        %864 = vmatprep.subr.mxu0 0.0
        %865 = vmatpush2.msra.mxu0 0.0
        %866 = vmatprep.subr.mxu0 0.0
        %867 = vmatpush2.msra.mxu0 0.0
        %868 = vmatprep.subr.mxu0 0.0
        %869 = vmatpush2.msra.mxu0 0.0
        %870 = vmatprep.subr.mxu0 0.0
        %871 = vmatpush2.msra.mxu0 0.0
        %872 = vmatprep.subr.mxu0 0.0
        %873 = vmatpush2.msra.mxu0 0.0
        %874 = vmatprep.subr.mxu0 0.0
        %875 = vmatpush2.msra.mxu0 0.0
        %876 = vmatprep.subr.mxu0 0.0
        %877 = vmatpush2.msra.mxu0 0.0
        %878 = vmatprep.subr.mxu0 0.0
        %879 = vmatpush2.msra.mxu0 0.0
        %880 = vmatprep.subr.mxu0 0.0
        %881 = vmatpush2.msra.mxu0 0.0
        %882 = vmatprep.subr.mxu0 0.0
        %883 = vmatpush2.msra.mxu0 0.0
        %884 = vmatprep.subr.mxu0 0.0
        %885 = vmatpush2.msra.mxu0 0.0
        %886 = vmatprep.subr.mxu0 0.0
        %887 = vmatpush2.msra.mxu0 0.0
        %888 = vmatprep.subr.mxu0 0.0
        %889 = vmatpush2.msra.mxu0 0.0
        %890 = vmatprep.subr.mxu0 0.0
        %891 = vmatpush2.msra.mxu0 0.0
        %892 = vmatprep.subr.mxu0 0.0
        %893 = vmatpush2.msra.mxu0 0.0
        %894 = vmatprep.mubr.f32.mxu0 0.0
        %895 = vmatmul.mubr.f32.gmra.mxu0 %v825
        %v896 = vpop.f32.mrf.mxu0
        %v897 = vadd.f32 %v822, %v896
        %v898 = vpop.f32.mrf.mxu0
        %899 = vdwg.mxu0
        %v900 = vadd.f32 %v815, %v897
        %v901 = vmax.f32 %v900, 0.0
        %902 = vst [vmem:[%s292] sm:$0xff] %v901
        %s903 = sand.u32 %s198, 1
        %s904 = scalar_lea.sflag [#allocation5], %s903
        %s905 = sand.u32 %s198, 1
        %s906 = smul.addr %s905, 8
        %s907 = scalar_lea.vmem [#allocation4], %s906
        // Predicated region
        $region117: #{tpu_custom_call.1} parent=47 // pred_check
          %p908 = pneg %p208
        $region118: #{tpu_custom_call.1} parent=47 // pred_check_branch
          %910 = sbr.rel (%p908) target = $region120
        $region119: #{tpu_custom_call.1} parent=47 // pred_region
          %s912 = ssub.s32 128, 128
          %913 = vsyncadd %s904, %s912
          %s914 = sadd.s32 %s27, %s26
          %s915 = smul.addr %s914, 128
          %s916 = scalar_lea.hbm %s8, %s915
          %s918 = sshll.u32 %s907, 4
          %s919 = int_to_ptr.vmem [resolvable:$true] %s918
          %921 = dma.vmem_to_hbm [thread:$0]  %s919, 128, %s916, %s904
        $region120: #{tpu_custom_call.1} parent=47 // pred_fallthru
          _
      $region48: #{tpu_custom_call.1} parent=5 // pred_fallthru
        _
      %p922 = scmp.le.s32.totalorder 2, %s17
      // Predicated region
      $region121: #{tpu_custom_call.1} parent=5 // pred_check
        %p923 = pneg %p922
      $region122: #{tpu_custom_call.1} parent=5 // pred_check_branch
        %925 = sbr.rel (%p923) target = $region124
      $region123: #{tpu_custom_call.1} parent=5 // pred_region
        %s926 = ssub.s32 %s17, 2
        // Predicated region
        $region125: #{tpu_custom_call.1} parent=123 // pred_check
          %p927 = pneg %p214
        $region126: #{tpu_custom_call.1} parent=123 // pred_check_branch
          %929 = sbr.rel (%p927) target = $region128
        $region127: #{tpu_custom_call.1} parent=123 // pred_region
          %s930 = sand.u32 %s199, 1
          %s931 = scalar_lea.sflag [#allocation5], %s930
          %s932 = sand.u32 %s199, 1
          %s933 = smul.addr %s932, 8
          %s934 = scalar_lea.vmem [#allocation4], %s933
          %935 = dma.done %s931, 128
        $region128: #{tpu_custom_call.1} parent=123 // pred_fallthru
          _
      $region124: #{tpu_custom_call.1} parent=5 // pred_fallthru
        _
    $region6: #{tpu_custom_call.1} parent=1 // loop_footer
      %s21 = sadd.s32 1, %s17
    $region7: #{tpu_custom_call.1} parent=1 // loop_footer_branch
      %16 = sbr.rel target = $region3
    $region8: #{tpu_custom_call.1} parent=1 // loop_exit
      _
    %936 = vsyncpa [#allocation5], 1
    %s937 = scalar_lea.sflag [#allocation5], 1
    %938 = vsyncpa %s937, 1
  %939 = vsyncmov [#allocation3]
  %s940 = vpop.sfrf %939
  %p941 = scmp.eq.s32.totalorder %s940, 0
  %p942 = pneg %p941
  %944 = shalt.err (%p942)
  %s945 = scalar_lea.sflag [#allocation3], 1
  %946 = vsyncmov %s945
  %s947 = vpop.sfrf %946
  %p948 = scmp.eq.s32.totalorder %s947, 0
  %p949 = pneg %p948
  %951 = shalt.err (%p949)

</llo_original>
